<compile_context>
chip_gen: v5e
topology: v5e:2x2
jax: 0.10.0
libtpu: 0.0.40
codegen_flags: <defaults>
</compile_context>

<pallas_src>
import functools

import jax
import jax.numpy as jnp
import numpy as np
from jax.experimental import pallas as pl
from jax.experimental.pallas import tpu as pltpu

COULOMB_FACTOR = 14.399645478425668
EPS = 1e-6  # torch.pairwise_distance eps: dist = || (x1 - x2) + eps ||_2


def _electrostatic_kernel(ifeat_ref, jfeat_ref, expand_ref, tri_ref, out_ref, *, scale):
    # ifeat_ref : (4N, G)   rows [0:N)=x_i+eps, [N:2N)=y_i+eps, [2N:3N)=z_i+eps, [3N:4N)=q_i ; lanes=g
    # jfeat_ref : (4, G*N)  rows x_j, y_j, z_j, q_j (q_j already zeroed for j >= n_atoms); lanes=(g,j)
    # expand_ref: (G, G*N)  E[g, g*N+j] = 1.0  (exact 0/1 lane-repeat matrix)
    # tri_ref   : (N, G*N)  tri[i, g*N+j] = 1.0 iff j > i
    # out_ref   : (1, G*N)  per-(g, j) column sums, already scaled by ke / energy_scale
    N = tri_ref.shape[0]

    # MXU: lane-repeat each graph's per-atom-i columns across that graph's N lanes.
    # Exact because E is 0/1 (one nonzero per output lane) and accumulation adds zeros.
    slabs = jnp.dot(ifeat_ref[...], expand_ref[...],
                    preferred_element_type=jnp.float32)          # (4N, G*N)
    xi = slabs[0 * N:1 * N]
    yi = slabs[1 * N:2 * N]
    zi = slabs[2 * N:3 * N]
    qi = slabs[3 * N:4 * N]

    jrow = jfeat_ref[...]                                        # (4, G*N)
    dx = xi - jrow[0:1]                                          # = x_i - x_j + eps
    dy = yi - jrow[1:2]
    dz = zi - jrow[2:3]
    dist2 = dx * dx + dy * dy + dz * dz                          # >= 3*eps^2 > 0 always

    # i<j triangle via precomputed 0/1 mask; j<n via pre-zeroed q_j; one EUP rsqrt per pair.
    pair = (qi * jrow[3:4]) * tri_ref[...] * jax.lax.rsqrt(dist2)   # (N, G*N)

    out_ref[...] = scale * jnp.sum(pair, axis=0, keepdims=True)  # (1, G*N) lane-dense store


def _choose_graphs_per_step(B, N):
    lane_fill = pl.cdiv(128, N)                 # graphs needed to fill the 128-lane axis
    target = pl.cdiv(2048, N)                   # ~2048 packed lanes/step amortizes ~0.35us step cost
    vmem_cap = max(1, (16 * 1024 * 1024) // (56 * N * N))   # keep live (N, G*N) f32 temps <= ~16 MiB
    g = min(max(lane_fill, min(target, vmem_cap)), 128)
    g = min(g, max(B, lane_fill))               # don't pad the batch beyond what lane-filling needs
    return max(1, g)


def electrostatic_correction(pos, charges, n_atoms, *, energy_scale=1.0,
                             graphs_per_step=None):
    """pos: (B, N, 3), charges: (B, N, 1) or (B, N), n_atoms: (B,) int -> (B, 1) f32."""
    B, N0, _ = pos.shape
    pos = pos.astype(jnp.float32)
    charges = charges.astype(jnp.float32).reshape(B, N0, 1)
    n_atoms = n_atoms.astype(jnp.int32)

    # Pad atom axis to a multiple of 8 so all in-kernel sublane slices stay tile-aligned.
    N = max(8, 8 * pl.cdiv(N0, 8))
    if N != N0:
        pos = jnp.pad(pos, ((0, 0), (0, N - N0), (0, 0)))
        charges = jnp.pad(charges, ((0, 0), (0, N - N0), (0, 0)))

    G = int(graphs_per_step) if graphs_per_step else _choose_graphs_per_step(B, N)
    G = max(1, G)
    nb = pl.cdiv(B, G)
    Bp = nb * G
    if Bp != B:
        pad = Bp - B
        pos = jnp.pad(pos, ((0, pad), (0, 0), (0, 0)))
        charges = jnp.pad(charges, ((0, pad), (0, 0), (0, 0)))
        n_atoms = jnp.pad(n_atoms, ((0, pad),))

    # Enforce j < n_atoms off the N^2 path: zero out-of-range charges once (O(B*N)).
    valid = jnp.arange(N, dtype=jnp.int32)[None, :] < n_atoms[:, None]      # (Bp, N)
    q = jnp.where(valid[..., None], charges, 0.0)                           # (Bp, N, 1)

    L = G * N

    # i-side features, EPS folded into the coordinates once (not per pair).
    feat_i = jnp.concatenate([pos + EPS, q], axis=-1)                       # (Bp, N, 4)
    ifeat = jnp.transpose(feat_i.reshape(nb, G, N, 4), (0, 3, 2, 1)).reshape(nb, 4 * N, G)
    # j-side features, lane order (g, j).
    feat_j = jnp.concatenate([pos, q], axis=-1)                             # (Bp, N, 4)
    jfeat = jnp.transpose(feat_j.reshape(nb, G, N, 4), (0, 3, 1, 2)).reshape(nb, 4, L)

    # Grid-invariant constants (constant block index -> DMA'd into VMEM once).
    lane_g = jnp.arange(L, dtype=jnp.int32) // N
    lane_j = jnp.arange(L, dtype=jnp.int32) % N
    expand = (lane_g[None, :] == jnp.arange(G, dtype=jnp.int32)[:, None]).astype(jnp.float32)  # (G, L)
    tri = (lane_j[None, :] > jnp.arange(N, dtype=jnp.int32)[:, None]).astype(jnp.float32)      # (N, L)

    scale = float(COULOMB_FACTOR) / float(energy_scale)
    kernel = functools.partial(_electrostatic_kernel, scale=scale)

    pairs = Bp * N * N
    cost = pl.CostEstimate(
        flops=int(12 * pairs + 8 * G * pairs),      # VPU pair math + MXU lane-repeat expansion
        transcendentals=int(pairs),                 # one rsqrt per pair
        bytes_accessed=int(4 * (ifeat.size + jfeat.size + expand.size + tri.size + nb * L)),
    )

    out = pl.pallas_call(
        kernel,
        out_shape=jax.ShapeDtypeStruct((nb, 1, L), jnp.float32),
        grid_spec=pltpu.PrefetchScalarGridSpec(
            num_scalar_prefetch=0,
            grid=(nb,),
            in_specs=[
                pl.BlockSpec((None, 4 * N, G), lambda b: (b, 0, 0)),   # i-side atom columns
                pl.BlockSpec((None, 4, L), lambda b: (b, 0, 0)),       # j-side lane rows
                pl.BlockSpec((G, L), lambda b: (0, 0)),                # 0/1 lane-repeat matrix
                pl.BlockSpec((N, L), lambda b: (0, 0)),                # i<j triangle
            ],
            out_specs=pl.BlockSpec((None, 1, L), lambda b: (b, 0, 0)), # lane-dense per-block output
        ),
        compiler_params=pltpu.CompilerParams(
            dimension_semantics=("parallel",),           # shard graph-blocks across TCs (v7x)
            vmem_limit_bytes=32 * 1024 * 1024,
        ),
        cost_estimate=cost,
    )(ifeat, jfeat, expand, tri)

    # Final O(B*N) segment-sum of the per-(g, j) column sums -> per-graph energies.
    e = out.reshape(Bp, N).sum(axis=-1)
    return e[:B, None]                                   # (B, 1)


def _reference(pos, charges, n_atoms, energy_scale=1.0):
    """Pure numpy f64 reference replicating the torch module (pair loop over i<j per graph)."""
    pos = np.asarray(pos, np.float64)
    charges = np.asarray(charges, np.float64)
    B = pos.shape[0]
    out = np.zeros((B, 1), np.float64)
    for b in range(B):
        n = int(n_atoms[b])
        e = 0.0
        for i in range(n):
            for j in range(i + 1, n):
                d = np.sqrt(np.sum((pos[b, i] - pos[b, j] + EPS) ** 2))
                e += charges[b, i, 0] * charges[b, j, 0] / d
        out[b, 0] = COULOMB_FACTOR * e / energy_scale
    return out


if __name__ == "__main__":
    # Two graphs with 7 and 5 atoms (ptr = [0, 7, 12]), padded to N = 8.
    B, N = 2, 8
    n_atoms = jnp.array([7, 5], dtype=jnp.int32)
    energy_scale = 2.0

    key = jax.random.PRNGKey(0)
    kp, kq = jax.random.split(key)
    pos = jax.random.uniform(kp, (B, N, 3), dtype=jnp.float32) * 5.0
    charges = jax.random.normal(kq, (B, N, 1), dtype=jnp.float32)

    out = electrostatic_correction(pos, charges, n_atoms, energy_scale=energy_scale)
    out = jax.block_until_ready(out)

    ref = _reference(np.asarray(pos), np.asarray(charges), np.asarray(n_atoms), energy_scale)
    np.testing.assert_allclose(np.asarray(out), ref, rtol=1e-4, atol=1e-5)

    print("KERNEL_OK")
</pallas_src>

<mosaic_0001>
module attributes {stable_mosaic.version = 11 : i64} {
  func.func @_electrostatic_kernel(%arg0: i32, %arg1: memref<1x32x16xf32, #tpu.memory_space<vmem>>, %arg2: memref<1x4x128xf32, #tpu.memory_space<vmem>>, %arg3: memref<16x128xf32, #tpu.memory_space<vmem>>, %arg4: memref<8x128xf32, #tpu.memory_space<vmem>>, %arg5: memref<1x1x128xf32, #tpu.memory_space<vmem>>) attributes {dimension_semantics = [#tpu.dimension_semantics<parallel>], iteration_bounds = array<i64: 1>, scalar_prefetch = 0 : i64, scratch_operands = 0 : i64, tpu.core_type = #tpu.core_type<tc>, window_params = [{transform_indices = @transform_0, window_bounds = array<i64: 1, 32, 16>}, {transform_indices = @transform_1, window_bounds = array<i64: 1, 4, 128>}, {pipeline_mode = #tpu.pipeline_mode<synchronous>, transform_indices = @transform_2, window_bounds = array<i64: 16, 128>}, {pipeline_mode = #tpu.pipeline_mode<synchronous>, transform_indices = @transform_3, window_bounds = array<i64: 8, 128>}, {transform_indices = @transform_4, window_bounds = array<i64: 1, 1, 128>}]} {
    %c0 = arith.constant 0 : index
    %c0_0 = arith.constant 0 : index
    %c0_1 = arith.constant 0 : index
    %0 = vector.load %arg1[%c0, %c0_0, %c0_1] : memref<1x32x16xf32, #tpu.memory_space<vmem>>, vector<1x32x16xf32>
    %1 = vector.shape_cast %0 : vector<1x32x16xf32> to vector<32x16xf32>
    %c0_2 = arith.constant 0 : index
    %c0_3 = arith.constant 0 : index
    %2 = vector.load %arg3[%c0_2, %c0_3] : memref<16x128xf32, #tpu.memory_space<vmem>>, vector<16x128xf32>
    %cst = arith.constant dense<0.000000e+00> : vector<32x128xf32>
    %3 = tpu.matmul %1, %2, %cst {dimension_numbers = #tpu.dot_dimension_numbers<[1], [0], [0], [1], [0, 0, 1, 1], [], []>} : vector<32x16xf32>, vector<16x128xf32>, vector<32x128xf32> -> vector<32x128xf32>
    %4 = vector.extract_strided_slice %3 {offsets = [0, 0], sizes = [8, 128], strides = [1, 1]} : vector<32x128xf32> to vector<8x128xf32>
    %5 = vector.extract_strided_slice %3 {offsets = [8, 0], sizes = [8, 128], strides = [1, 1]} : vector<32x128xf32> to vector<8x128xf32>
    %6 = vector.extract_strided_slice %3 {offsets = [16, 0], sizes = [8, 128], strides = [1, 1]} : vector<32x128xf32> to vector<8x128xf32>
    %7 = vector.extract_strided_slice %3 {offsets = [24, 0], sizes = [8, 128], strides = [1, 1]} : vector<32x128xf32> to vector<8x128xf32>
    %c0_4 = arith.constant 0 : index
    %c0_5 = arith.constant 0 : index
    %c0_6 = arith.constant 0 : index
    %8 = vector.load %arg2[%c0_4, %c0_5, %c0_6] : memref<1x4x128xf32, #tpu.memory_space<vmem>>, vector<1x4x128xf32>
    %9 = vector.shape_cast %8 : vector<1x4x128xf32> to vector<4x128xf32>
    %10 = vector.extract_strided_slice %9 {offsets = [0, 0], sizes = [1, 128], strides = [1, 1]} : vector<4x128xf32> to vector<1x128xf32>
    %11 = vector.broadcast %10 : vector<1x128xf32> to vector<8x128xf32>
    %12 = arith.subf %4, %11 : vector<8x128xf32>
    %13 = vector.extract_strided_slice %9 {offsets = [1, 0], sizes = [1, 128], strides = [1, 1]} : vector<4x128xf32> to vector<1x128xf32>
    %14 = vector.broadcast %13 : vector<1x128xf32> to vector<8x128xf32>
    %15 = arith.subf %5, %14 : vector<8x128xf32>
    %16 = vector.extract_strided_slice %9 {offsets = [2, 0], sizes = [1, 128], strides = [1, 1]} : vector<4x128xf32> to vector<1x128xf32>
    %17 = vector.broadcast %16 : vector<1x128xf32> to vector<8x128xf32>
    %18 = arith.subf %6, %17 : vector<8x128xf32>
    %19 = arith.mulf %12, %12 : vector<8x128xf32>
    %20 = arith.mulf %15, %15 : vector<8x128xf32>
    %21 = arith.addf %19, %20 : vector<8x128xf32>
    %22 = arith.mulf %18, %18 : vector<8x128xf32>
    %23 = arith.addf %21, %22 : vector<8x128xf32>
    %24 = vector.extract_strided_slice %9 {offsets = [3, 0], sizes = [1, 128], strides = [1, 1]} : vector<4x128xf32> to vector<1x128xf32>
    %25 = vector.broadcast %24 : vector<1x128xf32> to vector<8x128xf32>
    %26 = arith.mulf %7, %25 : vector<8x128xf32>
    %c0_7 = arith.constant 0 : index
    %c0_8 = arith.constant 0 : index
    %27 = vector.load %arg4[%c0_7, %c0_8] : memref<8x128xf32, #tpu.memory_space<vmem>>, vector<8x128xf32>
    %28 = arith.mulf %26, %27 : vector<8x128xf32>
    %29 = math.rsqrt %23 : vector<8x128xf32>
    %30 = arith.mulf %28, %29 : vector<8x128xf32>
    %cst_9 = arith.constant dense<0.000000e+00> : vector<128xf32>
    %31 = vector.multi_reduction <add>, %30, %cst_9 [0] : vector<8x128xf32> to vector<128xf32>
    %32 = vector.shape_cast %31 : vector<128xf32> to vector<1x128xf32>
    %cst_10 = arith.constant 7.1998229 : f32
    %33 = vector.broadcast %cst_10 : f32 to vector<1x128xf32>
    %34 = arith.mulf %33, %32 : vector<1x128xf32>
    %c0_11 = arith.constant 0 : index
    %c0_12 = arith.constant 0 : index
    %c0_13 = arith.constant 0 : index
    %35 = vector.load %arg5[%c0_11, %c0_12, %c0_13] : memref<1x1x128xf32, #tpu.memory_space<vmem>>, vector<1x1x128xf32>
    %36 = vector.shape_cast %35 : vector<1x1x128xf32> to vector<1x128xf32>
    %37 = vector.shape_cast %34 : vector<1x128xf32> to vector<1x1x128xf32>
    tpu.vector_store %arg5[%c0_11, %c0_12, %c0_13], %37 {strides = array<i32>} : memref<1x1x128xf32, #tpu.memory_space<vmem>>, vector<1x1x128xf32>,
    return
  }
  func.func @transform_0(%arg0: i32) -> (i32, i32, i32) {
    %c0_i32 = arith.constant 0 : i32
    %c0_i32_0 = arith.constant 0 : i32
    %c0_i32_1 = arith.constant 0 : i32
    return %arg0, %c0_i32, %c0_i32_0 : i32, i32, i32
  }
  func.func @transform_1(%arg0: i32) -> (i32, i32, i32) {
    %c0_i32 = arith.constant 0 : i32
    %c0_i32_0 = arith.constant 0 : i32
    %c0_i32_1 = arith.constant 0 : i32
    return %arg0, %c0_i32, %c0_i32_0 : i32, i32, i32
  }
  func.func @transform_2(%arg0: i32) -> (i32, i32) {
    %c0_i32 = arith.constant 0 : i32
    %c0_i32_0 = arith.constant 0 : i32
    %c0_i32_1 = arith.constant 0 : i32
    return %c0_i32, %c0_i32_0 : i32, i32
  }
  func.func @transform_3(%arg0: i32) -> (i32, i32) {
    %c0_i32 = arith.constant 0 : i32
    %c0_i32_0 = arith.constant 0 : i32
    %c0_i32_1 = arith.constant 0 : i32
    return %c0_i32, %c0_i32_0 : i32, i32
  }
  func.func @transform_4(%arg0: i32) -> (i32, i32, i32) {
    %c0_i32 = arith.constant 0 : i32
    %c0_i32_0 = arith.constant 0 : i32
    %c0_i32_1 = arith.constant 0 : i32
    return %arg0, %c0_i32, %c0_i32_0 : i32, i32, i32
  }
}

</mosaic_0001>

<llo_original>
// kernel: tpu_custom_call.1
$region0: #{tpu_custom_call.1}
  #allocation0 [shape = 'u32[]', space=smem, size = 0x4, offset = 0x4, fixed_abs, tag = 'smem constant byte address 0x4 - core index']
  #allocation1 [shape = 'u32[72,128]{1,0:T(1,128)}', space=vmem, size = 0x9000, scoped, tag = 'internal scratch']
  %s0 = inlined_call_operand.vmem [shape: f32[1,32,16], index: 0, kind: input, shape index: {}]
  %s1 = inlined_call_operand.vmem [shape: f32[1,4,128], index: 1, kind: input, shape index: {}]
  %s2 = inlined_call_operand.vmem [shape: f32[16,128], index: 2, kind: input, shape index: {}]
  %s3 = inlined_call_operand.vmem [shape: f32[8,128], index: 3, kind: input, shape index: {}]
  %s4 = inlined_call_operand.hbm [shape: f32[1,1,128], index: 4, kind: output, shape index: {}]
  %s5 = sld [smem:[#allocation0]]
  $region26: #{tpu_custom_call.1} parent=0
    _
  %s7 = ssub.s32 1, %s5
  %s8 = scalar_select 0, %s7, %s5
  $region1: #{tpu_custom_call.1} parent=0
    #allocation2 [shape = 'u8[512]{0}', space=vmem, size = 0x400, scoped, tag = 'output window, operand 0, single buffered']
    #allocation3 [shape = 's32[1]{0}', space=sflag, size = 0x4, scoped, tag = 'scoped memory for tpu_custom_call.1']
    %9 = vsyncpa [#allocation3], 0
    // Predicated region
    $region2: #{tpu_custom_call.1} parent=1 // pred_check
      _
    $region3: #{tpu_custom_call.1} parent=1 // pred_check_branch
      %11 = sbr.rel (0) target = $region5
    $region4: #{tpu_custom_call.1} parent=1 // pred_region
      _
    $region5: #{tpu_custom_call.1} parent=1 // pred_fallthru
      _
    // Predicated region
    $region6: #{tpu_custom_call.1} parent=1 // pred_check
      _
    $region7: #{tpu_custom_call.1} parent=1 // pred_check_branch
      %13 = sbr.rel (0) target = $region9
    $region8: #{tpu_custom_call.1} parent=1 // pred_region
      _
    $region9: #{tpu_custom_call.1} parent=1 // pred_fallthru
      _
    // Predicated region
    $region10: #{tpu_custom_call.1} parent=1 // pred_check
      _
    $region11: #{tpu_custom_call.1} parent=1 // pred_check_branch
      %15 = sbr.rel (0) target = $region13
    $region12: #{tpu_custom_call.1} parent=1 // pred_region
      _
    $region13: #{tpu_custom_call.1} parent=1 // pred_fallthru
      _
    // Predicated region
    $region14: #{tpu_custom_call.1} parent=1 // pred_check
      _
    $region15: #{tpu_custom_call.1} parent=1 // pred_check_branch
      %17 = sbr.rel (0) target = $region17
    $region16: #{tpu_custom_call.1} parent=1 // pred_region
      _
    $region17: #{tpu_custom_call.1} parent=1 // pred_fallthru
      _
    %v18 = vld [vmem:[%s0] sm:$0xff]
    %v19 = vld [vmem:[%s0 + $0x8] sm:$0xff]
    %v20 = vld [vmem:[%s0 + $0x10] sm:$0xff]
    %v21 = vld [vmem:[%s0 + $0x18] sm:$0xff]
    %v22 = vld [vmem:[%s2] sm:$0xff]
    %v23 = vld [vmem:[%s2 + $0x8] sm:$0xff]
    %vm24 = vcmask 130048
    %v26 = vsel %vm24, %v18, 0
    %v29 = vsel %vm24, %v19, 0
    %v32 = vsel %vm24, %v20, 0
    %v35 = vsel %vm24, %v21, 0
    %37 = vmatpush.msra.mxu0 0.0
    %38 = vmatpush.msra.mxu0 0.0
    %39 = vmatpush.msra.mxu0 0.0
    %40 = vmatpush.msra.mxu0 0.0
    %41 = vmatpush.msra.mxu0 0.0
    %42 = vmatpush.msra.mxu0 0.0
    %43 = vmatpush.msra.mxu0 0.0
    %44 = vmatpush.msra.mxu0 0.0
    %45 = vmatpush.msra.mxu0 0.0
    %46 = vmatpush.msra.mxu0 0.0
    %47 = vmatpush.msra.mxu0 0.0
    %48 = vmatpush.msra.mxu0 0.0
    %49 = vmatpush.msra.mxu0 0.0
    %50 = vmatpush.msra.mxu0 0.0
    %51 = vmatpush.msra.mxu0 %v23
    %52 = vmatpush.msra.mxu0 %v22
    %53 = vmatmul.f32.gmra.mxu0 %v26
    %v54 = vpop.f32.mrf.mxu0
    %v55 = vadd.f32 0.0, %v54
    %56 = vmatmul.f32.gmra.mxu0 %v29
    %v57 = vpop.f32.mrf.mxu0
    %v58 = vadd.f32 0.0, %v57
    %59 = vmatmul.f32.gmra.mxu0 %v32
    %v60 = vpop.f32.mrf.mxu0
    %v61 = vadd.f32 0.0, %v60
    %62 = vmatmul.f32.gmra.mxu0 %v35
    %v63 = vpop.f32.mrf.mxu0
    %v64 = vadd.f32 0.0, %v63
    %65 = vdwg.mxu0
    %v66 = vld [vmem:[%s1] sm:$0xf]
    %v67 = vperm.slane %v66, 0
    %v68 = vsub.f32 %v55, %v67
    %v69 = vperm.slane %v66, 1
    %v70 = vsub.f32 %v58, %v69
    %v71 = vperm.slane %v66, 2
    %v72 = vsub.f32 %v61, %v71
    %v73 = vmul.f32 %v68, %v68
    %v74 = vmul.f32 %v70, %v70
    %v75 = vadd.f32 %v73, %v74
    %v76 = vmul.f32 %v72, %v72
    %v77 = vadd.f32 %v75, %v76
    %v78 = vperm.slane %v66, 3
    %v79 = vmul.f32 %v64, %v78
    %v80 = vld [vmem:[%s3] sm:$0xff]
    %v81 = vmul.f32 %v79, %v80
    %v82 = vrsqrt.pop %v77
    %v83 = vmul.f32 %v82, %v77
    %v84 = vmul.f32 %v83, %v82
    %v85 = vmul.f32 0.5, %v84
    %v86 = vsub.f32 1.5, %v85
    %v87 = vmul.f32 %v82, %v86
    %vm88 = vweird.f32 %v77
    %vm89 = vweird.f32 %v82
    %vm90 = vmor %vm88, %vm89
    %v91 = vsel %vm90, %v82, %v87
    %v92 = vmul.f32 %v81, %v91
    %v93 = vrot.slane %v92, 4
    %v94 = vadd.f32 %v92, %v93
    %v95 = vrot.slane %v94, 2
    %v96 = vadd.f32 %v94, %v95
    %v97 = vrot.slane %v96, 1
    %v98 = vadd.f32 %v96, %v97
    %v99 = vmul.f32 %v98, 7.199823
    %100 = vst [vmem:[#allocation2] sm:$0x1] %v99
    // Predicated region
    $region18: #{tpu_custom_call.1} parent=1 // pred_check
      _
    $region19: #{tpu_custom_call.1} parent=1 // pred_check_branch
      %102 = sbr.rel (0) target = $region21
    $region20: #{tpu_custom_call.1} parent=1 // pred_region
      %104 = vsyncadd [#allocation3], 0
      %s106 = sshll.u32 [#allocation2], 4
      %s107 = int_to_ptr.vmem [resolvable:$true] %s106
      %s108 = sshll.u32 %s4, 4
      %s109 = int_to_ptr.hbm [resolvable:$true] %s108
      %111 = dma.vmem_to_hbm [thread:$0]  %s107, 16, %s109, [#allocation3]
    $region21: #{tpu_custom_call.1} parent=1 // pred_fallthru
      _
    // Predicated region
    $region22: #{tpu_custom_call.1} parent=1 // pred_check
      _
    $region23: #{tpu_custom_call.1} parent=1 // pred_check_branch
      %113 = sbr.rel (0) target = $region25
    $region24: #{tpu_custom_call.1} parent=1 // pred_region
      %115 = dma.done [#allocation3], 16
    $region25: #{tpu_custom_call.1} parent=1 // pred_fallthru
      _
    %116 = vsyncpa [#allocation3], 1

</llo_original>
